<compile_context>
chip_gen: v7x
topology: tpu7x:2x2x1
jax: 0.10.0
libtpu: 0.0.40
codegen_flags: <defaults>
</compile_context>

<pallas_src>
import jax
import jax.numpy as jnp
import numpy as np
from jax.experimental import pallas as pl
from jax.experimental.pallas import tpu as pltpu

_LANES = 128


def _round_up(x: int, m: int) -> int:
    return ((x + m - 1) // m) * m


def _cdiv(a: int, b: int) -> int:
    return (a + b - 1) // b


def _default_vmem_limit() -> int:
    """64 MiB on 128-MiB chips (v5e/v6e); ~48 MiB on 64-MiB chips (v7x)."""
    cap = 128 * 1024 * 1024
    try:
        info = pltpu.get_tpu_info()
        cap = int(getattr(info, "vmem_capacity_bytes", cap))
    except Exception:
        pass
    return int(min(64 * 1024 * 1024, (cap * 3) // 4))


def _make_loss_kernel(criterion: str, sqrt_transform: bool, tau, huber_delta: float,
                      F: int, TF: int, needs_col_mask: bool, compute_dtype):
    """Builds the Pallas kernel body for a given (static) loss configuration."""
    if criterion not in ("l1", "l2", "nse", "huber", "quantile", "expectile"):
        raise ValueError(f"unknown criterion {criterion!r}")
    assert TF % _LANES == 0
    n_chunks = TF // _LANES

    def kernel(x_ref, t_ref, err_ref, cnt_ref):
        j = pl.program_id(1)  # feature (reduction) axis, innermost

        # err_ref / cnt_ref blocks are VMEM-resident across the whole j loop
        # (output index_map is constant along j) -> accumulate directly into them.
        @pl.when(j == 0)
        def _():
            err_ref[...] = jnp.zeros_like(err_ref)
            cnt_ref[...] = jnp.zeros_like(cnt_ref)

        x = x_ref[...]
        t = t_ref[...]
        if x.dtype != compute_dtype:
            x = x.astype(compute_dtype)
        if t.dtype != compute_dtype:
            t = t.astype(compute_dtype)

        if sqrt_transform:
            x = jnp.sqrt(x)
            # clamp(min=0); NaN propagates so the mask still catches missing targets
            t = jnp.sqrt(jnp.maximum(t, 0.0))

        # isfinite(t) spelled as a plain VPU compare (NaN and +-Inf both fail).
        mask = jnp.abs(t) < jnp.inf
        if needs_col_mask:
            # Ragged feature tail: columns >= F are garbage reads -> force-invalid.
            col = jax.lax.broadcasted_iota(jnp.int32, mask.shape, 1) + j * TF
            mask = jnp.logical_and(mask, col < F)

        # Fused select: (target.where(mask, input) - input) == where(mask, t - x, 0),
        # and loss(0) == 0 for every criterion below, so no second mask-select needed.
        e = jnp.where(mask, t - x, 0.0)

        if criterion in ("l2", "nse"):
            elem = e * e
        elif criterion == "l1":
            elem = jnp.abs(e)
        elif criterion == "huber":
            ae = jnp.abs(e)
            elem = jnp.where(
                ae <= huber_delta,
                0.5 * e * e,
                huber_delta * (ae - 0.5 * huber_delta),
            )
        elif criterion == "quantile":
            elem = jnp.maximum((tau - 1.0) * e, tau * e)
        else:  # expectile
            elem = jnp.where(e >= 0.0, e * e * tau, e * e * (1.0 - tau))

        mask_f = mask.astype(jnp.float32)

        # Lane-wise partial accumulation: the hot loop is pure 128-lane-aligned VPU
        # adds (upcast of the bf16 partials happens here, not on the raw inputs);
        # the cross-lane reduction happens once, outside the kernel.
        p_err = elem[:, 0:_LANES].astype(jnp.float32)
        p_cnt = mask_f[:, 0:_LANES]
        for c in range(1, n_chunks):
            lo = c * _LANES
            p_err = p_err + elem[:, lo:lo + _LANES].astype(jnp.float32)
            p_cnt = p_cnt + mask_f[:, lo:lo + _LANES]

        err_ref[...] += p_err
        cnt_ref[...] += p_cnt

    return kernel


def _masked_row_sums(x2d, t2d, criterion, sqrt_transform, tau, huber_delta=0.3,
                     tb_cap=256, tf_cap=2048, bf16_compute=True):
    """Runs the Pallas kernel; returns per-sample (err_sum, valid_count), shape (B,)."""
    B, F = x2d.shape
    tb_cap = max(8, _round_up(int(tb_cap), 8))
    tf_cap = max(_LANES, _round_up(int(tf_cap), _LANES))

    # Feature tiling: TF is always a multiple of 128; ragged tails are masked in-kernel.
    TF = min(tf_cap, _round_up(F, _LANES))
    nf = _cdiv(F, TF)
    needs_col_mask = (F % TF) != 0

    # Batch tiling: aim for >= 2 programs on the "parallel" axis whenever B > 8 so both
    # v7x TensorCores get work (on 1-TC chips the extra tile just runs sequentially).
    if B > 8:
        TB = min(tb_cap, _round_up(_cdiv(B, 2), 8))
    else:
        TB = 8
    nb = _cdiv(B, TB)

    # bf16 inputs keep elementwise math in bf16 (packed VPU on v6e/v7x); everything
    # else computes in f32. Accumulation is always f32.
    if bf16_compute and x2d.dtype == jnp.bfloat16 and t2d.dtype == jnp.bfloat16:
        compute_dtype = jnp.dtype(jnp.bfloat16)
    else:
        compute_dtype = jnp.dtype(jnp.float32)

    kernel = _make_loss_kernel(criterion, sqrt_transform, tau, huber_delta,
                               F, TF, needs_col_mask, compute_dtype)

    bytes_accessed = (B * F * (x2d.dtype.itemsize + t2d.dtype.itemsize)
                      + 2 * nb * TB * _LANES * 4)
    cost = pl.CostEstimate(
        flops=6 * B * F,
        transcendentals=(2 * B * F) if sqrt_transform else 0,
        bytes_accessed=int(bytes_accessed),
    )

    err_p, cnt_p = pl.pallas_call(
        kernel,
        out_shape=(
            jax.ShapeDtypeStruct((nb * TB, _LANES), jnp.float32),
            jax.ShapeDtypeStruct((nb * TB, _LANES), jnp.float32),
        ),
        grid=(nb, nf),
        in_specs=[
            pl.BlockSpec((TB, TF), lambda i, j: (i, j)),
            pl.BlockSpec((TB, TF), lambda i, j: (i, j)),
        ],
        out_specs=(
            pl.BlockSpec((TB, _LANES), lambda i, j: (i, 0)),
            pl.BlockSpec((TB, _LANES), lambda i, j: (i, 0)),
        ),
        compiler_params=pltpu.CompilerParams(
            dimension_semantics=("parallel", "arbitrary"),
            vmem_limit_bytes=_default_vmem_limit(),
        ),
        cost_estimate=cost,
    )(x2d, t2d)

    # Tiny host-side cross-lane reduction; ragged batch rows (>= B) are discarded here.
    err_sum = jnp.sum(err_p[:B], axis=-1)
    cnt = jnp.sum(cnt_p[:B], axis=-1)
    return err_sum, cnt


def _as_kernel_dtype(a):
    """Keep native float width (bf16/f16/f32) to minimize HBM traffic; else upcast."""
    if a.dtype in (jnp.bfloat16, jnp.float16, jnp.float32):
        return a
    return a.astype(jnp.float32)


class RegressionLossPallas:
    """JAX/Pallas re-implementation of the PyTorch RegressionLoss module."""

    LOSS_FUNCTIONS = ("l1", "l2", "huber", "nse", "quantile", "expectile")
    LOSS_FUNCTIONS_WITH_TAU = ("quantile", "expectile")

    def __init__(self, criterion: str, sample_wise: bool = True, sqrt_transform: bool = False,
                 tile_batch: int = 256, tile_feature: int = 2048, bf16_compute: bool = True):
        criterion = criterion.lower()
        if criterion not in self.LOSS_FUNCTIONS:
            raise ValueError(f"invalid criterion {criterion!r}")
        if criterion == "nse" and not sample_wise:
            raise ValueError("Cannot use criterion 'nse' with sample_wise=False.")
        self.criterion = criterion
        self.sample_wise = sample_wise
        self.sqrt_transform = sqrt_transform
        self.huber_delta = 0.3
        self.nse_constant = 0.1
        # Tunable tile caps (swept per shape / per chip generation if desired).
        self.tile_batch = tile_batch
        self.tile_feature = tile_feature
        # Keep bf16 elementwise math on the VPU (v6e/v7x win, neutral-correct on v5e).
        self.bf16_compute = bf16_compute

    def __call__(self, input, target, tau=None, basin_std=None):
        if self.criterion in self.LOSS_FUNCTIONS_WITH_TAU:
            if tau is None:
                raise ValueError(f"argument `tau` required with criterion={self.criterion!r}")
            if not 0.0 <= float(tau) <= 1.0:
                raise ValueError(f"argument `tau` is out of range [0, 1] with tau={tau}")
        if self.criterion == "nse" and basin_std is None:
            raise ValueError("argument `basin_std` required with criterion='nse'.")

        B = input.shape[0]
        x2d = _as_kernel_dtype(jnp.reshape(input, (B, -1)))
        t2d = _as_kernel_dtype(jnp.reshape(target, (B, -1)))

        err_sum, cnt = _masked_row_sums(
            x2d, t2d, self.criterion, self.sqrt_transform,
            None if tau is None else float(tau), self.huber_delta,
            tb_cap=self.tile_batch, tf_cap=self.tile_feature,
            bf16_compute=self.bf16_compute,
        )

        # Final scalar reductions: tiny O(B) glue, left to XLA.
        if self.criterion == "nse":
            basin_std = jnp.asarray(basin_std, jnp.float32)
            basin_norm = (basin_std + self.nse_constant) ** 2
            batch_err = err_sum / basin_norm / cnt
            weight = 1.0 / (1.0 + jnp.exp(-(cnt - 100.0) / 20.0))
            return jnp.sum(batch_err * weight) / jnp.sum(weight)

        if self.sample_wise:
            return jnp.mean(err_sum / cnt)
        return jnp.sum(err_sum) / jnp.sum(cnt)


# ---------------------------------------------------------------------------
# Pure-JAX reference (mirrors the PyTorch forward exactly) for verification.
# ---------------------------------------------------------------------------
def _reference(criterion, sample_wise, sqrt_transform, x, t, tau=None, basin_std=None,
               constant=0.1, delta=0.3):
    x = x.astype(jnp.float32)
    t = t.astype(jnp.float32)
    if sqrt_transform:
        x = jnp.sqrt(x)
        t = jnp.sqrt(jnp.maximum(t, 0.0))   # clamp(min=0); NaN propagates
    red = tuple(range(1, t.ndim))
    mask = jnp.isfinite(t)
    tt = jnp.where(mask, t, x)
    if criterion == "nse":
        bn = (basin_std.reshape((-1,) + (1,) * (t.ndim - 1)) + constant) ** 2
        ee = (tt - x) ** 2 / bn
        nvalid = jnp.sum(mask, axis=red).astype(jnp.float32)
        w = 1.0 / (1.0 + jnp.exp(-(nvalid - 100.0) / 20.0))
        be = jnp.sum(ee, axis=red) / nvalid
        return jnp.sum(be * w) / jnp.sum(w)
    e = tt - x
    if criterion == "l2":
        elem = e * e
    elif criterion == "l1":
        elem = jnp.abs(e)
    elif criterion == "huber":
        ae = jnp.abs(e)
        elem = jnp.where(ae <= delta, 0.5 * e * e, delta * (ae - 0.5 * delta))
    elif criterion == "quantile":
        elem = jnp.maximum((tau - 1.0) * e, tau * e)
    elif criterion == "expectile":
        elem = jnp.where(e >= 0.0, e * e * tau, e * e * (1.0 - tau))
    if sample_wise:
        return jnp.mean(jnp.sum(elem, axis=red) / jnp.sum(mask, axis=red))
    return jnp.sum(elem) / jnp.sum(mask)


if __name__ == "__main__":
    key = jax.random.PRNGKey(0)
    k1, k2, k3, k4, k5, k6 = jax.random.split(key, 6)

    # ------------------------- case set A: f32, default tiles -------------------------
    B, C, H, W = 2, 4, 16, 16
    x = jax.random.uniform(k1, (B, C, H, W), jnp.float32, 0.1, 2.0)   # predictions >= 0
    t = jax.random.uniform(k2, (B, C, H, W), jnp.float32, 0.0, 2.0)
    nan_mask = jax.random.uniform(k3, (B, C, H, W)) < 0.15
    t = jnp.where(nan_mask, jnp.nan, t)
    t = t.at[0, 0, 0, 0].set(jnp.inf)
    basin_std = jnp.array([0.7, 1.3], jnp.float32)

    cases = [
        dict(criterion="l2", sample_wise=True, sqrt_transform=False),
        dict(criterion="l2", sample_wise=False, sqrt_transform=False),
        dict(criterion="l1", sample_wise=True, sqrt_transform=True),
        dict(criterion="huber", sample_wise=False, sqrt_transform=False),
        dict(criterion="quantile", sample_wise=True, sqrt_transform=False),
        dict(criterion="expectile", sample_wise=True, sqrt_transform=False),
        dict(criterion="nse", sample_wise=True, sqrt_transform=False),
    ]
    for cfg in cases:
        loss_mod = RegressionLossPallas(**cfg)
        kwargs = {}
        if cfg["criterion"] in ("quantile", "expectile"):
            kwargs["tau"] = 0.3
        if cfg["criterion"] == "nse":
            kwargs["basin_std"] = basin_std
        out = jax.block_until_ready(loss_mod(x, t, **kwargs))
        ref = _reference(cfg["criterion"], cfg["sample_wise"], cfg["sqrt_transform"],
                         x, t, tau=kwargs.get("tau"), basin_std=kwargs.get("basin_std"))
        np.testing.assert_allclose(np.asarray(out), np.asarray(ref), rtol=1e-5, atol=1e-6)

    # ---------------- case set B: multi-tile feature axis + ragged tail mask ----------------
    # F = 1024, tile_feature = 384 -> 3 feature tiles, last one partially out of range.
    for cfg in [dict(criterion="l2", sample_wise=True, sqrt_transform=False),
                dict(criterion="huber", sample_wise=False, sqrt_transform=False)]:
        loss_mod = RegressionLossPallas(tile_batch=8, tile_feature=384, **cfg)
        out = jax.block_until_ready(loss_mod(x, t))
        ref = _reference(cfg["criterion"], cfg["sample_wise"], cfg["sqrt_transform"], x, t)
        np.testing.assert_allclose(np.asarray(out), np.asarray(ref), rtol=1e-5, atol=1e-6)

    # --------- case set C: bf16 inputs, ragged batch AND feature tiles (no host padding) ---------
    B2 = 13
    x2 = jax.random.uniform(k4, (B2, 3, 10, 7), jnp.float32, 0.1, 2.0).astype(jnp.bfloat16)
    t2 = jax.random.uniform(k5, (B2, 3, 10, 7), jnp.float32, 0.0, 2.0)
    nm2 = jax.random.uniform(k6, (B2, 3, 10, 7)) < 0.2
    t2 = jnp.where(nm2, jnp.nan, t2).astype(jnp.bfloat16)

    # f32-math path on bf16 inputs: bit-equivalent element values vs the f32 reference.
    loss_f32 = RegressionLossPallas("l1", sample_wise=True, tile_batch=8, tile_feature=128,
                                    bf16_compute=False)
    out = jax.block_until_ready(loss_f32(x2, t2))
    ref = _reference("l1", True, False, x2, t2)
    np.testing.assert_allclose(np.asarray(out), np.asarray(ref), rtol=1e-4, atol=1e-5)

    # bf16-math path (packed VPU): elementwise rounding vs the f32 reference ~ O(2^-9).
    loss_bf16 = RegressionLossPallas("l1", sample_wise=True, tile_batch=8, tile_feature=128,
                                     bf16_compute=True)
    out = jax.block_until_ready(loss_bf16(x2, t2))
    np.testing.assert_allclose(np.asarray(out), np.asarray(ref), rtol=2e-2, atol=1e-3)

    # --------------------- case set D: docstring example (tiny shape) ---------------------
    inp = jnp.ones((2, 2), jnp.float32)
    tgt = jnp.full((2, 2), 2.0, jnp.float32).at[0, 0].set(jnp.nan)
    out = jax.block_until_ready(RegressionLossPallas("l2", sample_wise=True)(inp, tgt))
    np.testing.assert_allclose(np.asarray(out), 1.0, rtol=1e-6, atol=1e-6)

    print("KERNEL_OK")
</pallas_src>

<mosaic_0001>
module attributes {stable_mosaic.version = 11 : i64} {
  func.func @kernel(%arg0: i32, %arg1: i32, %arg2: memref<8x1024xf32, #tpu.memory_space<vmem>>, %arg3: memref<8x1024xf32, #tpu.memory_space<vmem>>, %arg4: memref<8x128xf32, #tpu.memory_space<vmem>>, %arg5: memref<8x128xf32, #tpu.memory_space<vmem>>) attributes {dimension_semantics = [#tpu.dimension_semantics<parallel>, #tpu.dimension_semantics<arbitrary>], iteration_bounds = array<i64: 1, 1>, scalar_prefetch = 0 : i64, scratch_operands = 0 : i64, tpu.core_type = #tpu.core_type<tc>, window_params = [{transform_indices = @transform_0, window_bounds = array<i64: 8, 1024>}, {transform_indices = @transform_1, window_bounds = array<i64: 8, 1024>}, {transform_indices = @transform_2, window_bounds = array<i64: 8, 128>}, {transform_indices = @transform_3, window_bounds = array<i64: 8, 128>}]} {
    %c0_i32 = arith.constant 0 : i32
    %0 = arith.cmpi eq, %arg1, %c0_i32 : i32
    %1 = arith.extui %0 : i1 to i32
    %c0_i32_0 = arith.constant 0 : i32
    %2 = arith.cmpi ne, %1, %c0_i32_0 : i32
    scf.if %2 {
      %cst_13 = arith.constant 0.000000e+00 : f32
      %50 = vector.broadcast %cst_13 : f32 to vector<8x128xf32>
      %c0_14 = arith.constant 0 : index
      %c0_15 = arith.constant 0 : index
      %51 = vector.load %arg4[%c0_14, %c0_15] : memref<8x128xf32, #tpu.memory_space<vmem>>, vector<8x128xf32>
      tpu.vector_store %arg4[%c0_14, %c0_15], %50 {strides = array<i32>} : memref<8x128xf32, #tpu.memory_space<vmem>>, vector<8x128xf32>,
      %cst_16 = arith.constant 0.000000e+00 : f32
      %52 = vector.broadcast %cst_16 : f32 to vector<8x128xf32>
      %c0_17 = arith.constant 0 : index
      %c0_18 = arith.constant 0 : index
      %53 = vector.load %arg5[%c0_17, %c0_18] : memref<8x128xf32, #tpu.memory_space<vmem>>, vector<8x128xf32>
      tpu.vector_store %arg5[%c0_17, %c0_18], %52 {strides = array<i32>} : memref<8x128xf32, #tpu.memory_space<vmem>>, vector<8x128xf32>,
    } else {
    }
    %c0 = arith.constant 0 : index
    %c0_1 = arith.constant 0 : index
    %3 = vector.load %arg2[%c0, %c0_1] : memref<8x1024xf32, #tpu.memory_space<vmem>>, vector<8x1024xf32>
    %c0_2 = arith.constant 0 : index
    %c0_3 = arith.constant 0 : index
    %4 = vector.load %arg3[%c0_2, %c0_3] : memref<8x1024xf32, #tpu.memory_space<vmem>>, vector<8x1024xf32>
    %5 = math.absf %4 : vector<8x1024xf32>
    %cst = arith.constant 0x7F800000 : f32
    %6 = vector.broadcast %cst : f32 to vector<8x1024xf32>
    %7 = arith.cmpf olt, %5, %6 : vector<8x1024xf32>
    %8 = arith.subf %4, %3 : vector<8x1024xf32>
    %cst_4 = arith.constant 0.000000e+00 : f32
    %9 = vector.broadcast %cst_4 : f32 to vector<8x1024xf32>
    %10 = arith.select %7, %8, %9 : vector<8x1024xi1>, vector<8x1024xf32>
    %11 = arith.mulf %10, %10 : vector<8x1024xf32>
    %12 = arith.extui %7 : vector<8x1024xi1> to vector<8x1024xi32>
    %13 = arith.sitofp %12 : vector<8x1024xi32> to vector<8x1024xf32>
    %14 = vector.extract_strided_slice %11 {offsets = [0, 0], sizes = [8, 128], strides = [1, 1]} : vector<8x1024xf32> to vector<8x128xf32>
    %15 = vector.extract_strided_slice %13 {offsets = [0, 0], sizes = [8, 128], strides = [1, 1]} : vector<8x1024xf32> to vector<8x128xf32>
    %16 = vector.extract_strided_slice %11 {offsets = [0, 128], sizes = [8, 128], strides = [1, 1]} : vector<8x1024xf32> to vector<8x128xf32>
    %17 = arith.addf %14, %16 : vector<8x128xf32>
    %18 = vector.extract_strided_slice %13 {offsets = [0, 128], sizes = [8, 128], strides = [1, 1]} : vector<8x1024xf32> to vector<8x128xf32>
    %19 = arith.addf %15, %18 : vector<8x128xf32>
    %20 = vector.extract_strided_slice %11 {offsets = [0, 256], sizes = [8, 128], strides = [1, 1]} : vector<8x1024xf32> to vector<8x128xf32>
    %21 = arith.addf %17, %20 : vector<8x128xf32>
    %22 = vector.extract_strided_slice %13 {offsets = [0, 256], sizes = [8, 128], strides = [1, 1]} : vector<8x1024xf32> to vector<8x128xf32>
    %23 = arith.addf %19, %22 : vector<8x128xf32>
    %24 = vector.extract_strided_slice %11 {offsets = [0, 384], sizes = [8, 128], strides = [1, 1]} : vector<8x1024xf32> to vector<8x128xf32>
    %25 = arith.addf %21, %24 : vector<8x128xf32>
    %26 = vector.extract_strided_slice %13 {offsets = [0, 384], sizes = [8, 128], strides = [1, 1]} : vector<8x1024xf32> to vector<8x128xf32>
    %27 = arith.addf %23, %26 : vector<8x128xf32>
    %28 = vector.extract_strided_slice %11 {offsets = [0, 512], sizes = [8, 128], strides = [1, 1]} : vector<8x1024xf32> to vector<8x128xf32>
    %29 = arith.addf %25, %28 : vector<8x128xf32>
    %30 = vector.extract_strided_slice %13 {offsets = [0, 512], sizes = [8, 128], strides = [1, 1]} : vector<8x1024xf32> to vector<8x128xf32>
    %31 = arith.addf %27, %30 : vector<8x128xf32>
    %32 = vector.extract_strided_slice %11 {offsets = [0, 640], sizes = [8, 128], strides = [1, 1]} : vector<8x1024xf32> to vector<8x128xf32>
    %33 = arith.addf %29, %32 : vector<8x128xf32>
    %34 = vector.extract_strided_slice %13 {offsets = [0, 640], sizes = [8, 128], strides = [1, 1]} : vector<8x1024xf32> to vector<8x128xf32>
    %35 = arith.addf %31, %34 : vector<8x128xf32>
    %36 = vector.extract_strided_slice %11 {offsets = [0, 768], sizes = [8, 128], strides = [1, 1]} : vector<8x1024xf32> to vector<8x128xf32>
    %37 = arith.addf %33, %36 : vector<8x128xf32>
    %38 = vector.extract_strided_slice %13 {offsets = [0, 768], sizes = [8, 128], strides = [1, 1]} : vector<8x1024xf32> to vector<8x128xf32>
    %39 = arith.addf %35, %38 : vector<8x128xf32>
    %40 = vector.extract_strided_slice %11 {offsets = [0, 896], sizes = [8, 128], strides = [1, 1]} : vector<8x1024xf32> to vector<8x128xf32>
    %41 = arith.addf %37, %40 : vector<8x128xf32>
    %42 = vector.extract_strided_slice %13 {offsets = [0, 896], sizes = [8, 128], strides = [1, 1]} : vector<8x1024xf32> to vector<8x128xf32>
    %43 = arith.addf %39, %42 : vector<8x128xf32>
    %c0_5 = arith.constant 0 : index
    %c0_6 = arith.constant 0 : index
    %44 = vector.load %arg4[%c0_5, %c0_6] : memref<8x128xf32, #tpu.memory_space<vmem>>, vector<8x128xf32>
    %45 = arith.addf %44, %41 : vector<8x128xf32>
    %c0_7 = arith.constant 0 : index
    %c0_8 = arith.constant 0 : index
    %46 = vector.load %arg4[%c0_7, %c0_8] : memref<8x128xf32, #tpu.memory_space<vmem>>, vector<8x128xf32>
    tpu.vector_store %arg4[%c0_7, %c0_8], %45 {strides = array<i32>} : memref<8x128xf32, #tpu.memory_space<vmem>>, vector<8x128xf32>,
    %c0_9 = arith.constant 0 : index
    %c0_10 = arith.constant 0 : index
    %47 = vector.load %arg5[%c0_9, %c0_10] : memref<8x128xf32, #tpu.memory_space<vmem>>, vector<8x128xf32>
    %48 = arith.addf %47, %43 : vector<8x128xf32>
    %c0_11 = arith.constant 0 : index
    %c0_12 = arith.constant 0 : index
    %49 = vector.load %arg5[%c0_11, %c0_12] : memref<8x128xf32, #tpu.memory_space<vmem>>, vector<8x128xf32>
    tpu.vector_store %arg5[%c0_11, %c0_12], %48 {strides = array<i32>} : memref<8x128xf32, #tpu.memory_space<vmem>>, vector<8x128xf32>,
    return
  }
  func.func @transform_0(%arg0: i32, %arg1: i32) -> (i32, i32) {
    %c0_i32 = arith.constant 0 : i32
    return %arg0, %arg1 : i32, i32
  }
  func.func @transform_1(%arg0: i32, %arg1: i32) -> (i32, i32) {
    %c0_i32 = arith.constant 0 : i32
    return %arg0, %arg1 : i32, i32
  }
  func.func @transform_2(%arg0: i32, %arg1: i32) -> (i32, i32) {
    %c0_i32 = arith.constant 0 : i32
    %c0_i32_0 = arith.constant 0 : i32
    return %arg0, %c0_i32 : i32, i32
  }
  func.func @transform_3(%arg0: i32, %arg1: i32) -> (i32, i32) {
    %c0_i32 = arith.constant 0 : i32
    %c0_i32_0 = arith.constant 0 : i32
    return %arg0, %c0_i32 : i32, i32
  }
}

</mosaic_0001>

<llo_original>
// kernel: tpu_custom_call.1
$region0: #{tpu_custom_call.1}
  #allocation0 [shape = 'u32[]', space=smem, size = 0x4, offset = 0x4, fixed_abs, tag = 'smem constant byte address 0x4 - core index']
  #allocation1 [shape = 'u32[144,128]{1,0:T(1,128)}', space=vmem, size = 0x12000, scoped, tag = 'internal scratch']
  %s0 = inlined_call_operand.hbm [shape: f32[2,1024], index: 0, kind: input, shape index: {}]
  %s1 = inlined_call_operand.hbm [shape: f32[2,1024], index: 1, kind: input, shape index: {}]
  %s2 = inlined_call_operand.hbm [shape: f32[8,128], index: 2, kind: output, shape index: {0}]
  %s3 = inlined_call_operand.hbm [shape: f32[8,128], index: 3, kind: output, shape index: {1}]
  %4 = xla_tuple %s2, %s3
  %s5 = sld [smem:[#allocation0]]
  $region38: #{tpu_custom_call.1} parent=0
    _
  %s7 = ssub.s32 1, %s5
  %s8 = scalar_select 0, %s7, %s5
  $region1: #{tpu_custom_call.1} parent=0
    #allocation2 [shape = 'u8[32768]{0}', space=vmem, size = 0x8000, scoped, tag = 'input window, operand 0, single buffered']
    #allocation3 [shape = 's32[1]{0}', space=sflag, size = 0x4, scoped, tag = 'scoped memory for tpu_custom_call.1']
    #allocation4 [shape = 's32[1]{0}', space=sflag, size = 0x4, scoped, tag = 'scoped memory for tpu_custom_call.1']
    #allocation5 [shape = 'u8[32768]{0}', space=vmem, size = 0x8000, scoped, tag = 'input window, operand 1, single buffered']
    #allocation6 [shape = 's32[1]{0}', space=sflag, size = 0x4, scoped, tag = 'scoped memory for tpu_custom_call.1']
    #allocation7 [shape = 'u8[4096]{0}', space=vmem, size = 0x1000, scoped, tag = 'output window, operand 0, single buffered']
    #allocation8 [shape = 'u8[4096]{0}', space=vmem, size = 0x1000, scoped, tag = 'output window, operand 1, single buffered']
    #allocation9 [shape = 's32[1]{0}', space=sflag, size = 0x4, scoped, tag = 'scoped memory for tpu_custom_call.1']
    %9 = vsyncpa [#allocation3], 0
    %10 = vsyncpa [#allocation6], 0
    %11 = vsyncpa [#allocation4], 0
    %12 = vsyncpa [#allocation9], 0
    // Predicated region
    $region2: #{tpu_custom_call.1} parent=1 // pred_check
      _
    $region3: #{tpu_custom_call.1} parent=1 // pred_check_branch
      %14 = sbr.rel (0) target = $region5
    $region4: #{tpu_custom_call.1} parent=1 // pred_region
      %s16 = ssub.s32 1024, 256
      %17 = vsyncadd [#allocation3], %s16
      %s18 = sshll.u32 [#allocation2], 4
      %s19 = int_to_ptr.vmem [resolvable:$true] %s18
      %24 = dma.hbm_to_vmem [thread:$0]  %s0, 256, %s19, [#allocation3], 256, 256, 16
    $region5: #{tpu_custom_call.1} parent=1 // pred_fallthru
      _
    // Predicated region
    $region6: #{tpu_custom_call.1} parent=1 // pred_check
      _
    $region7: #{tpu_custom_call.1} parent=1 // pred_check_branch
      %26 = sbr.rel (0) target = $region9
    $region8: #{tpu_custom_call.1} parent=1 // pred_region
      %s28 = ssub.s32 1024, 256
      %29 = vsyncadd [#allocation6], %s28
      %s30 = sshll.u32 [#allocation5], 4
      %s31 = int_to_ptr.vmem [resolvable:$true] %s30
      %36 = dma.hbm_to_vmem [thread:$0]  %s1, 256, %s31, [#allocation6], 256, 256, 16
    $region9: #{tpu_custom_call.1} parent=1 // pred_fallthru
      _
    // Predicated region
    $region10: #{tpu_custom_call.1} parent=1 // pred_check
      _
    $region11: #{tpu_custom_call.1} parent=1 // pred_check_branch
      %38 = sbr.rel (0) target = $region13
    $region12: #{tpu_custom_call.1} parent=1 // pred_region
      %39 = dma.done [#allocation3], 1024
    $region13: #{tpu_custom_call.1} parent=1 // pred_fallthru
      _
    // Predicated region
    $region14: #{tpu_custom_call.1} parent=1 // pred_check
      _
    $region15: #{tpu_custom_call.1} parent=1 // pred_check_branch
      %41 = sbr.rel (0) target = $region17
    $region16: #{tpu_custom_call.1} parent=1 // pred_region
      %42 = dma.done [#allocation6], 1024
    $region17: #{tpu_custom_call.1} parent=1 // pred_fallthru
      _
    %p43 = scmp.eq.s32.totalorder 0, 0
    // Predicated region
    $region18: #{tpu_custom_call.1} parent=1 // pred_check
      %p44 = pneg %p43
    $region19: #{tpu_custom_call.1} parent=1 // pred_check_branch
      %46 = sbr.rel (%p44) target = $region21
    $region20: #{tpu_custom_call.1} parent=1 // pred_region
      %47 = vst [vmem:[#allocation7] sm:$0xff] 0.0
      %48 = vst [vmem:[#allocation8] sm:$0xff] 0.0
    $region21: #{tpu_custom_call.1} parent=1 // pred_fallthru
      _
    %v49 = vld [vmem:[#allocation2] sm:$0xff]
    %v50 = vld [vmem:[#allocation2 + $0x8] sm:$0xff]
    %v51 = vld [vmem:[#allocation2 + $0x10] sm:$0xff]
    %v52 = vld [vmem:[#allocation2 + $0x18] sm:$0xff]
    %v53 = vld [vmem:[#allocation2 + $0x20] sm:$0xff]
    %v54 = vld [vmem:[#allocation2 + $0x28] sm:$0xff]
    %v55 = vld [vmem:[#allocation2 + $0x30] sm:$0xff]
    %v56 = vld [vmem:[#allocation2 + $0x38] sm:$0xff]
    %v57 = vld [vmem:[#allocation5] sm:$0xff]
    %v58 = vld [vmem:[#allocation5 + $0x8] sm:$0xff]
    %v59 = vld [vmem:[#allocation5 + $0x10] sm:$0xff]
    %v60 = vld [vmem:[#allocation5 + $0x18] sm:$0xff]
    %v61 = vld [vmem:[#allocation5 + $0x20] sm:$0xff]
    %v62 = vld [vmem:[#allocation5 + $0x28] sm:$0xff]
    %v63 = vld [vmem:[#allocation5 + $0x30] sm:$0xff]
    %v64 = vld [vmem:[#allocation5 + $0x38] sm:$0xff]
    %v65 = vand.u32 2147483647, %v57
    %v66 = vand.u32 2147483647, %v58
    %v67 = vand.u32 2147483647, %v59
    %v68 = vand.u32 2147483647, %v60
    %v69 = vand.u32 2147483647, %v61
    %v70 = vand.u32 2147483647, %v62
    %v71 = vand.u32 2147483647, %v63
    %v72 = vand.u32 2147483647, %v64
    %vm73 = vcmp.lt.f32.partialorder %v65, inf
    %vm74 = vcmp.lt.f32.partialorder %v66, inf
    %vm75 = vcmp.lt.f32.partialorder %v67, inf
    %vm76 = vcmp.lt.f32.partialorder %v68, inf
    %vm77 = vcmp.lt.f32.partialorder %v69, inf
    %vm78 = vcmp.lt.f32.partialorder %v70, inf
    %vm79 = vcmp.lt.f32.partialorder %v71, inf
    %vm80 = vcmp.lt.f32.partialorder %v72, inf
    %v81 = vsub.f32 %v57, %v49
    %v82 = vsub.f32 %v58, %v50
    %v83 = vsub.f32 %v59, %v51
    %v84 = vsub.f32 %v60, %v52
    %v85 = vsub.f32 %v61, %v53
    %v86 = vsub.f32 %v62, %v54
    %v87 = vsub.f32 %v63, %v55
    %v88 = vsub.f32 %v64, %v56
    %v89 = vsel %vm73, %v81, 0.0
    %v90 = vsel %vm74, %v82, 0.0
    %v91 = vsel %vm75, %v83, 0.0
    %v92 = vsel %vm76, %v84, 0.0
    %v93 = vsel %vm77, %v85, 0.0
    %v94 = vsel %vm78, %v86, 0.0
    %v95 = vsel %vm79, %v87, 0.0
    %v96 = vsel %vm80, %v88, 0.0
    %v97 = vmul.f32 %v89, %v89
    %v98 = vmul.f32 %v90, %v90
    %v99 = vmul.f32 %v91, %v91
    %v100 = vmul.f32 %v92, %v92
    %v101 = vmul.f32 %v93, %v93
    %v102 = vmul.f32 %v94, %v94
    %v103 = vmul.f32 %v95, %v95
    %v104 = vmul.f32 %v96, %v96
    %v105 = vsel %vm73, 1, 0
    %v106 = vsel %vm74, 1, 0
    %v107 = vsel %vm75, 1, 0
    %v108 = vsel %vm76, 1, 0
    %v109 = vsel %vm77, 1, 0
    %v110 = vsel %vm78, 1, 0
    %v111 = vsel %vm79, 1, 0
    %v112 = vsel %vm80, 1, 0
    %v113 = vcvt.s32.f32 %v105
    %v114 = vcvt.s32.f32 %v106
    %v115 = vcvt.s32.f32 %v107
    %v116 = vcvt.s32.f32 %v108
    %v117 = vcvt.s32.f32 %v109
    %v118 = vcvt.s32.f32 %v110
    %v119 = vcvt.s32.f32 %v111
    %v120 = vcvt.s32.f32 %v112
    %v125 = vrot.slane %v97, 2
    %v126 = vrot.slane %v99, 2
    %v127 = vrot.slane %v101, 2
    %v128 = vrot.slane %v103, 2
    %v133 = vadd.f32 %v97, %v125
    %v134 = vadd.f32 %v99, %v126
    %v135 = vadd.f32 %v101, %v127
    %v136 = vadd.f32 %v103, %v128
    %v141 = vrot.slane %v113, 2
    %v142 = vrot.slane %v115, 2
    %v143 = vrot.slane %v117, 2
    %v144 = vrot.slane %v119, 2
    %v149 = vadd.f32 %v113, %v141
    %v150 = vadd.f32 %v115, %v142
    %v151 = vadd.f32 %v117, %v143
    %v152 = vadd.f32 %v119, %v144
    %v153 = vrot.slane %v97, 4
    %v154 = vrot.slane %v99, 4
    %v155 = vrot.slane %v101, 4
    %v156 = vrot.slane %v103, 4
    %v161 = vadd.f32 %v133, %v153
    %v162 = vadd.f32 %v134, %v154
    %v163 = vadd.f32 %v135, %v155
    %v164 = vadd.f32 %v136, %v156
    %v165 = vrot.slane %v113, 4
    %v166 = vrot.slane %v115, 4
    %v167 = vrot.slane %v117, 4
    %v168 = vrot.slane %v119, 4
    %v173 = vadd.f32 %v149, %v165
    %v174 = vadd.f32 %v150, %v166
    %v175 = vadd.f32 %v151, %v167
    %v176 = vadd.f32 %v152, %v168
    %v177 = vrot.slane %v97, 6
    %v178 = vrot.slane %v99, 6
    %v179 = vrot.slane %v101, 6
    %v180 = vrot.slane %v103, 6
    %v185 = vadd.f32 %v161, %v177
    %v186 = vadd.f32 %v162, %v178
    %v187 = vadd.f32 %v163, %v179
    %v188 = vadd.f32 %v164, %v180
    %v189 = vrot.slane %v113, 6
    %v190 = vrot.slane %v115, 6
    %v191 = vrot.slane %v117, 6
    %v192 = vrot.slane %v119, 6
    %v197 = vadd.f32 %v173, %v189
    %v198 = vadd.f32 %v174, %v190
    %v199 = vadd.f32 %v175, %v191
    %v200 = vadd.f32 %v176, %v192
    %v201 = vadd.f32 %v185, %v98
    %v202 = vadd.f32 %v186, %v100
    %v203 = vadd.f32 %v187, %v102
    %v204 = vadd.f32 %v188, %v104
    %v205 = vadd.f32 %v197, %v114
    %v206 = vadd.f32 %v198, %v116
    %v207 = vadd.f32 %v199, %v118
    %v208 = vadd.f32 %v200, %v120
    %v213 = vrot.slane %v98, 2
    %v214 = vrot.slane %v100, 2
    %v215 = vrot.slane %v102, 2
    %v216 = vrot.slane %v104, 2
    %v221 = vadd.f32 %v201, %v213
    %v222 = vadd.f32 %v202, %v214
    %v223 = vadd.f32 %v203, %v215
    %v224 = vadd.f32 %v204, %v216
    %v229 = vrot.slane %v114, 2
    %v230 = vrot.slane %v116, 2
    %v231 = vrot.slane %v118, 2
    %v232 = vrot.slane %v120, 2
    %v237 = vadd.f32 %v205, %v229
    %v238 = vadd.f32 %v206, %v230
    %v239 = vadd.f32 %v207, %v231
    %v240 = vadd.f32 %v208, %v232
    %v241 = vrot.slane %v98, 4
    %v242 = vrot.slane %v100, 4
    %v243 = vrot.slane %v102, 4
    %v244 = vrot.slane %v104, 4
    %v249 = vadd.f32 %v221, %v241
    %v250 = vadd.f32 %v222, %v242
    %v251 = vadd.f32 %v223, %v243
    %v252 = vadd.f32 %v224, %v244
    %v253 = vrot.slane %v114, 4
    %v254 = vrot.slane %v116, 4
    %v255 = vrot.slane %v118, 4
    %v256 = vrot.slane %v120, 4
    %v261 = vadd.f32 %v237, %v253
    %v262 = vadd.f32 %v238, %v254
    %v263 = vadd.f32 %v239, %v255
    %v264 = vadd.f32 %v240, %v256
    %v265 = vrot.slane %v98, 6
    %v266 = vrot.slane %v100, 6
    %v267 = vrot.slane %v102, 6
    %v268 = vrot.slane %v104, 6
    %v273 = vadd.f32 %v249, %v265
    %v274 = vadd.f32 %v250, %v266
    %v275 = vadd.f32 %v251, %v267
    %v276 = vadd.f32 %v252, %v268
    %v277 = vrot.slane %v114, 6
    %v278 = vrot.slane %v116, 6
    %v279 = vrot.slane %v118, 6
    %v280 = vrot.slane %v120, 6
    %v285 = vadd.f32 %v261, %v277
    %v286 = vadd.f32 %v262, %v278
    %v287 = vadd.f32 %v263, %v279
    %v288 = vadd.f32 %v264, %v280
    %v289 = vld [vmem:[#allocation7] sm:$0xff]
    %v294 = vcombine.low %v273, %v274
    %v295 = vcombine.low %v275, %v276
    %v297 = vunpack.c.l.s4 1983009808
    %v298 = vunpack.c.0.s8 %v297
    %v299 = vlaneseq
    %v300 = vshrl.u32 %v299, 7
    %v301 = vsub.s32 %v298, %v300
    %v302 = vrot.slane %v294, %v301
    %v304 = vunpack.c.l.s4 1983009808
    %v305 = vunpack.c.0.s8 %v304
    %v306 = vlaneseq
    %v307 = vshrl.u32 %v306, 7
    %v308 = vsub.s32 %v305, %v307
    %v309 = vrot.slane %v295, %v308
    %v310 = vcombine.low %v302, %v309
    %v312 = vadd.f32 %v289, %v310
    %313 = vst [vmem:[#allocation7] sm:$0xff] %v312
    %v314 = vld [vmem:[#allocation8] sm:$0xff]
    %v319 = vcombine.low %v285, %v286
    %v320 = vcombine.low %v287, %v288
    %v322 = vunpack.c.l.s4 1983009808
    %v323 = vunpack.c.0.s8 %v322
    %v324 = vlaneseq
    %v325 = vshrl.u32 %v324, 7
    %v326 = vsub.s32 %v323, %v325
    %v327 = vrot.slane %v319, %v326
    %v329 = vunpack.c.l.s4 1983009808
    %v330 = vunpack.c.0.s8 %v329
    %v331 = vlaneseq
    %v332 = vshrl.u32 %v331, 7
    %v333 = vsub.s32 %v330, %v332
    %v334 = vrot.slane %v320, %v333
    %v335 = vcombine.low %v327, %v334
    %v337 = vadd.f32 %v314, %v335
    %338 = vst [vmem:[#allocation8] sm:$0xff] %v337
    // Predicated region
    $region22: #{tpu_custom_call.1} parent=1 // pred_check
      _
    $region23: #{tpu_custom_call.1} parent=1 // pred_check_branch
      %340 = sbr.rel (0) target = $region25
    $region24: #{tpu_custom_call.1} parent=1 // pred_region
      %s342 = ssub.s32 128, 128
      %343 = vsyncadd [#allocation4], %s342
      %s345 = sshll.u32 [#allocation7], 4
      %s346 = int_to_ptr.vmem [resolvable:$true] %s345
      %348 = dma.vmem_to_hbm [thread:$0]  %s346, 128, %s2, [#allocation4]
    $region25: #{tpu_custom_call.1} parent=1 // pred_fallthru
      _
    // Predicated region
    $region26: #{tpu_custom_call.1} parent=1 // pred_check
      _
    $region27: #{tpu_custom_call.1} parent=1 // pred_check_branch
      %350 = sbr.rel (0) target = $region29
    $region28: #{tpu_custom_call.1} parent=1 // pred_region
      %s352 = ssub.s32 128, 128
      %353 = vsyncadd [#allocation9], %s352
      %s355 = sshll.u32 [#allocation8], 4
      %s356 = int_to_ptr.vmem [resolvable:$true] %s355
      %358 = dma.vmem_to_hbm [thread:$0]  %s356, 128, %s3, [#allocation9]
    $region29: #{tpu_custom_call.1} parent=1 // pred_fallthru
      _
    // Predicated region
    $region30: #{tpu_custom_call.1} parent=1 // pred_check
      _
    $region31: #{tpu_custom_call.1} parent=1 // pred_check_branch
      %360 = sbr.rel (0) target = $region33
    $region32: #{tpu_custom_call.1} parent=1 // pred_region
      %361 = dma.done [#allocation4], 128
    $region33: #{tpu_custom_call.1} parent=1 // pred_fallthru
      _
    // Predicated region
    $region34: #{tpu_custom_call.1} parent=1 // pred_check
      _
    $region35: #{tpu_custom_call.1} parent=1 // pred_check_branch
      %363 = sbr.rel (0) target = $region37
    $region36: #{tpu_custom_call.1} parent=1 // pred_region
      %364 = dma.done [#allocation9], 128
    $region37: #{tpu_custom_call.1} parent=1 // pred_fallthru
      _
    %365 = vsyncpa [#allocation3], 1
    %366 = vsyncpa [#allocation6], 1
    %367 = vsyncpa [#allocation4], 1
    %368 = vsyncpa [#allocation9], 1

</llo_original>
